<compile_context>
chip_gen: v7x
topology: tpu7x:2x2x1
jax: 0.10.0
libtpu: 0.0.40
codegen_flags: <defaults>
</compile_context>

<pallas_src>
import math
import functools

import jax
import jax.numpy as jnp
from jax.experimental import pallas as pl
from jax.experimental.pallas import tpu as pltpu


NEG_BIG = -9e15                      # same mask constant as the PyTorch layer
_RESIDENT_WH_MAX_BYTES = 4 << 20     # resident Wh budget (x2 buffers stays << v7x scoped VMEM)


def _round_up(x, m):
    return (x + m - 1) // m * m


def _choose_tiles(n, tm, tn):
    """Pick (n_pad, tm, tn) so that tm | tn | n_pad and blocks satisfy the (8,128) rule."""
    if n <= 128:
        t = _round_up(max(n, 8), 8)
        return t, t, t
    tn = min(tn, _round_up(n, 128))
    tm = min(tm, tn)
    if tn % tm:
        tm = tn
    return _round_up(n, tn), tm, tn


def prepare_adjacency(adj, *, tm=256, tn=512):
    """(adj > 0) -> padded int8 mask.  Hoist out of per-layer calls: do it once per graph."""
    n = adj.shape[0]
    n_pad, _, _ = _choose_tiles(n, tm, tn)
    adj_i8 = (adj > 0).astype(jnp.int8)
    if n_pad > n:
        adj_i8 = jnp.pad(adj_i8, ((0, n_pad - n), (0, n_pad - n)))
    return adj_i8


def _proj_kernel(h_ref, w_ref, afg_ref, wh_ref, fg_ref):
    """Per row-tile: Wh for all heads (f32 MXU) + fused f/g attention-logit terms."""
    wh = jnp.dot(h_ref[...], w_ref[...], preferred_element_type=jnp.float32)   # (TM, H*F_out)
    # FG[:, :H] = f (Wh_i . a1 per head),  FG[:, H:] = g (Wh_i . a2 per head)
    fg_ref[...] = jnp.dot(wh, afg_ref[...], preferred_element_type=jnp.float32)
    wh_ref[...] = wh.astype(wh_ref.dtype)                                       # bf16 for stage 2


def _attn_kernel(adj_ref, f_ref, gT_ref, wh_ref, out_ref,
                 acc_ref, m_ref, l_ref, *,
                 alpha, f_out, n_heads, concat, tn, wh_resident):
    """Masked online-softmax + aggregation for one (query-tile, key-tile) step."""
    ki = pl.program_id(1)
    tm = acc_ref.shape[0]

    @pl.when(ki == 0)
    def _():
        m_ref[...] = jnp.full_like(m_ref, -jnp.inf)
        l_ref[...] = jnp.zeros_like(l_ref)
        acc_ref[...] = jnp.zeros_like(acc_ref)

    # Additive mask bias computed ONCE per (qi, ki) step: integer compare (no i8->f32
    # convert) and no per-head select inside the head loop.
    bias = jnp.where(adj_ref[...] != 0, 0.0, NEG_BIG).astype(jnp.float32)       # (TM, TN)

    if wh_resident:
        k0 = pl.multiple_of(ki * tn, tn)
        wh_k = wh_ref[pl.ds(k0, tn), :]            # key rows of the VMEM-resident (n_pad, hf) slab
    else:
        wh_k = wh_ref[...]                         # streamed (TN, hf) key tile
    ones_col = jnp.ones((tn, 1), jnp.bfloat16)     # row-sum on the MXU instead of the XLU

    m_all = m_ref[...]                             # (TM, H)
    l_all = l_ref[...]                             # (TM, H)

    pv_parts, corr_parts, m_parts, l_parts = [], [], [], []
    for hd in range(n_heads):                      # static unroll (small H)
        c0 = hd * f_out
        e = f_ref[:, hd:hd + 1] + gT_ref[hd:hd + 1, :]                 # (TM, TN) lane-dense
        e = jnp.maximum(e, alpha * e)                                  # LeakyReLU (0 < alpha < 1)
        s = e + bias                                                   # mask non-edges
        m_prev = m_all[:, hd:hd + 1]
        m_new = jnp.maximum(m_prev, jnp.max(s, axis=1, keepdims=True))
        corr = jnp.exp(m_prev - m_new)
        p = jnp.exp(s - m_new).astype(jnp.bfloat16)                    # (TM, TN)
        psum = jnp.dot(p, ones_col, preferred_element_type=jnp.float32)          # (TM, 1)  MXU
        pv = jnp.dot(p, wh_k[:, c0:c0 + f_out], preferred_element_type=jnp.float32)  # (TM, F_out)
        m_parts.append(m_new)
        l_parts.append(corr * l_all[:, hd:hd + 1] + psum)
        corr_parts.append(jnp.broadcast_to(corr, (tm, f_out)))
        pv_parts.append(pv)

    m_ref[...] = jnp.concatenate(m_parts, axis=1)
    l_ref[...] = jnp.concatenate(l_parts, axis=1)
    # Single full-width lane-dense accumulator update per ki step (no per-head 32-lane RMW).
    acc_ref[...] = (jnp.concatenate(corr_parts, axis=1) * acc_ref[...]
                    + jnp.concatenate(pv_parts, axis=1))

    @pl.when(ki == pl.num_programs(1) - 1)
    def _():
        inv_l = 1.0 / l_ref[...]                   # exact reciprocal; once per query tile
        scale = jnp.concatenate(
            [jnp.broadcast_to(inv_l[:, hd:hd + 1], (tm, f_out)) for hd in range(n_heads)],
            axis=1)                                # (TM, H*F_out)
        hp = acc_ref[...] * scale
        if concat:
            hp = jnp.where(hp > 0, hp, jnp.expm1(hp))                  # ELU
        out_ref[...] = hp.astype(out_ref.dtype)    # one unmasked lane-dense store


def gat_forward(adj, h, W_all, a_all, *, alpha, concat=True, tm=256, tn=512):
    """Multi-head GAT forward. Returns (N, H*F_out) == torch.cat(head outputs, dim=1)."""
    N, f_in = h.shape
    H, f_in2, f_out = W_all.shape
    assert f_in == f_in2
    assert a_all.shape == (H, 2 * f_out, 1)
    hf = H * f_out

    n_pad, tm, tn = _choose_tiles(N, tm, tn)

    # Accept a pre-prepared (padded int8) adjacency so the O(N^2) cast/pad runs once per graph.
    if adj.dtype == jnp.int8 and adj.shape == (n_pad, n_pad):
        adj_i8 = adj
    else:
        assert adj.shape == (N, N)
        adj_i8 = prepare_adjacency(adj, tm=tm, tn=tn)

    h_p = jnp.pad(h, ((0, n_pad - N), (0, 0))) if n_pad > N else h
    h_p = h_p.astype(jnp.float32)

    # ---- parameters in kernel-friendly layouts (tiny, once per call) ----
    # W_cat[:, hd*F_out:(hd+1)*F_out] == W_all[hd]
    w_cat = jnp.transpose(W_all, (1, 0, 2)).reshape(f_in, hf).astype(jnp.float32)
    # Block-diagonal A_fg so that  Wh_cat @ A_fg == [f_all | g_all]  (shape (N, 2H)).
    a1 = a_all[:, :f_out, 0]                               # (H, F_out)
    a2 = a_all[:, f_out:, 0]                               # (H, F_out)
    eye_h = jnp.eye(H, dtype=jnp.float32)
    A1 = (a1[:, :, None] * eye_h[:, None, :]).reshape(hf, H)
    A2 = (a2[:, :, None] * eye_h[:, None, :]).reshape(hf, H)
    a_fg = jnp.concatenate([A1, A2], axis=1).astype(jnp.float32)       # (HF, 2H)

    # ---- stage 1: projection + attention-logit terms ----
    wh_cat, fg = pl.pallas_call(
        _proj_kernel,
        out_shape=(jax.ShapeDtypeStruct((n_pad, hf), jnp.bfloat16),
                   jax.ShapeDtypeStruct((n_pad, 2 * H), jnp.float32)),
        grid_spec=pltpu.PrefetchScalarGridSpec(
            num_scalar_prefetch=0,
            grid=(n_pad // tm,),
            in_specs=[
                pl.BlockSpec((tm, f_in), lambda i: (i, 0)),            # h rows (f32)
                pl.BlockSpec((f_in, hf), lambda i: (0, 0)),            # W_cat (shared)
                pl.BlockSpec((hf, 2 * H), lambda i: (0, 0)),           # A_fg  (shared)
            ],
            out_specs=[
                pl.BlockSpec((tm, hf), lambda i: (i, 0)),              # Wh_cat (bf16)
                pl.BlockSpec((tm, 2 * H), lambda i: (i, 0)),           # [f | g]
            ],
        ),
        compiler_params=pltpu.CompilerParams(dimension_semantics=("parallel",)),
    )(h_p, w_cat, a_fg)

    f_all = fg[:, :H]            # (n_pad, H)
    gT = fg[:, H:].T             # (H, n_pad)  -- tiny O(N*H) transpose

    # Key-side Wh fully VMEM-resident when it fits a v7x-safe budget (DMA'd once for the
    # whole grid instead of once per (qi, ki)); otherwise streamed per ki tile.
    wh_resident = n_pad * hf * 2 <= _RESIDENT_WH_MAX_BYTES
    if wh_resident:
        wh_spec = pl.BlockSpec((n_pad, hf), lambda qi, ki: (0, 0))
        wh_buf_bytes = 2 * n_pad * hf * 2
    else:
        wh_spec = pl.BlockSpec((tn, hf), lambda qi, ki: (ki, 0))
        wh_buf_bytes = 2 * tn * hf * 2

    vmem_est = (2 * tm * tn                       # adj int8 tile (double buffered)
                + wh_buf_bytes                    # key-side Wh
                + 2 * tm * hf * 4                 # output tile (double buffered)
                + tm * hf * 4                     # acc scratch
                + 2 * tm * 128 * 4                # m / l scratch (lane padded)
                + 2 * (tm * 128 * 4 + 8 * tn * 4))   # f / gT tiles (padded)
    vmem_limit = int(min(max(2 * vmem_est, 32 << 20), 64 << 20))

    kernel = functools.partial(
        _attn_kernel, alpha=float(alpha), f_out=int(f_out), n_heads=int(H),
        concat=bool(concat), tn=int(tn), wh_resident=bool(wh_resident))

    # ---- stage 2: tiled masked online-softmax + aggregation ----
    out_p = pl.pallas_call(
        kernel,
        out_shape=jax.ShapeDtypeStruct((n_pad, hf), jnp.float32),
        grid_spec=pltpu.PrefetchScalarGridSpec(
            num_scalar_prefetch=0,
            grid=(n_pad // tm, n_pad // tn),
            in_specs=[
                pl.BlockSpec((tm, tn), lambda qi, ki: (qi, ki)),       # adj mask tile (int8)
                pl.BlockSpec((tm, H), lambda qi, ki: (qi, 0)),         # f for query rows
                pl.BlockSpec((H, tn), lambda qi, ki: (0, ki)),         # g for key cols
                wh_spec,                                               # Wh for key rows (bf16)
            ],
            out_specs=pl.BlockSpec((tm, hf), lambda qi, ki: (qi, 0)),
            scratch_shapes=[
                pltpu.VMEM((tm, hf), jnp.float32),   # running weighted sums (all heads, concat layout)
                pltpu.VMEM((tm, H), jnp.float32),    # running max per head
                pltpu.VMEM((tm, H), jnp.float32),    # running denom per head
            ],
        ),
        compiler_params=pltpu.CompilerParams(
            dimension_semantics=("parallel", "arbitrary"),
            vmem_limit_bytes=vmem_limit),
    )(adj_i8, f_all, gT, wh_cat)

    return out_p[:N]


def _xavier_uniform(key, shape, gain):
    fan_in, fan_out = shape[0], shape[1]
    bound = gain * math.sqrt(6.0 / (fan_in + fan_out))
    return jax.random.uniform(key, shape, jnp.float32, minval=-bound, maxval=bound)


def _reference_forward(adj, h, W_all, a_all, alpha, concat=True):
    """Pure-JAX f32 reference mirroring the PyTorch module (eval mode)."""
    outs = []
    H, _, f_out = W_all.shape
    for hd in range(H):
        Wh = h @ W_all[hd]
        a1, a2 = a_all[hd, :f_out, :], a_all[hd, f_out:, :]
        e = (Wh @ a1) + (Wh @ a2).T
        e = jnp.where(e > 0, e, alpha * e)
        att = jnp.where(adj > 0, e, -9e15)
        att = jax.nn.softmax(att, axis=1)
        hp = att @ Wh
        outs.append(jax.nn.elu(hp) if concat else hp)
    return jnp.concatenate(outs, axis=1)


if __name__ == "__main__":
    # Shapes chosen so stage 2 exercises multiple query tiles (grid = (2, 1) with TM=256,
    # TN=512) and heads * out_features = 128 -> lane-dense output slab.
    N = 512
    in_features = 64
    out_features = 32
    heads = 4
    alpha = 0.2          # LeakyReLU negative slope
    dropout = 0.5        # unused at inference
    concat = True

    key = jax.random.PRNGKey(0)
    k_h, k_adj, k_w, k_a = jax.random.split(key, 4)

    h = jax.random.normal(k_h, (N, in_features), jnp.float32)
    adj = (jax.random.uniform(k_adj, (N, N)) > 0.8).astype(jnp.float32)
    adj = jnp.minimum(adj + jnp.eye(N, dtype=jnp.float32), 1.0)   # self-loops: no all-masked rows

    gain = 1.414
    w_keys = jax.random.split(k_w, heads)
    a_keys = jax.random.split(k_a, heads)
    W_all = jnp.stack([_xavier_uniform(w_keys[i], (in_features, out_features), gain)
                       for i in range(heads)])
    a_all = jnp.stack([_xavier_uniform(a_keys[i], (2 * out_features, 1), gain)
                       for i in range(heads)])

    # Graph preprocessing hoisted out of the layer call (reused across layers / forward passes).
    adj_i8 = prepare_adjacency(adj)

    out = gat_forward(adj_i8, h, W_all, a_all, alpha=alpha, concat=concat)
    out = jax.block_until_ready(out)

    ref = _reference_forward(adj, h, W_all, a_all, alpha, concat=concat)
    assert out.shape == (N, heads * out_features)
    # bf16 Wh / P operands on the MXU -> relaxed tolerance vs the f32 reference.
    max_err = float(jnp.max(jnp.abs(out - ref)))
    assert jnp.allclose(out, ref, atol=5e-2, rtol=5e-2), f"mismatch vs reference (max abs err {max_err})"

    print("KERNEL_OK")
</pallas_src>

<mosaic_0001>
module attributes {stable_mosaic.version = 11 : i64} {
  func.func @_proj_kernel(%arg0: i32, %arg1: memref<256x64xf32, #tpu.memory_space<vmem>>, %arg2: memref<64x128xf32, #tpu.memory_space<vmem>>, %arg3: memref<128x8xf32, #tpu.memory_space<vmem>>, %arg4: memref<256x128xbf16, #tpu.memory_space<vmem>>, %arg5: memref<256x8xf32, #tpu.memory_space<vmem>>) attributes {dimension_semantics = [#tpu.dimension_semantics<parallel>], iteration_bounds = array<i64: 2>, scalar_prefetch = 0 : i64, scratch_operands = 0 : i64, tpu.core_type = #tpu.core_type<tc>, window_params = [{transform_indices = @transform_0, window_bounds = array<i64: 256, 64>}, {pipeline_mode = #tpu.pipeline_mode<synchronous>, transform_indices = @transform_1, window_bounds = array<i64: 64, 128>}, {pipeline_mode = #tpu.pipeline_mode<synchronous>, transform_indices = @transform_2, window_bounds = array<i64: 128, 8>}, {transform_indices = @transform_3, window_bounds = array<i64: 256, 128>}, {transform_indices = @transform_4, window_bounds = array<i64: 256, 8>}]} {
    %c0 = arith.constant 0 : index
    %c0_0 = arith.constant 0 : index
    %0 = vector.load %arg1[%c0, %c0_0] : memref<256x64xf32, #tpu.memory_space<vmem>>, vector<256x64xf32>
    %c0_1 = arith.constant 0 : index
    %c0_2 = arith.constant 0 : index
    %1 = vector.load %arg2[%c0_1, %c0_2] : memref<64x128xf32, #tpu.memory_space<vmem>>, vector<64x128xf32>
    %cst = arith.constant dense<0.000000e+00> : vector<256x128xf32>
    %2 = tpu.matmul %0, %1, %cst {dimension_numbers = #tpu.dot_dimension_numbers<[1], [0], [0], [1], [0, 0, 1, 1], [], []>} : vector<256x64xf32>, vector<64x128xf32>, vector<256x128xf32> -> vector<256x128xf32>
    %c0_3 = arith.constant 0 : index
    %c0_4 = arith.constant 0 : index
    %3 = vector.load %arg3[%c0_3, %c0_4] : memref<128x8xf32, #tpu.memory_space<vmem>>, vector<128x8xf32>
    %cst_5 = arith.constant dense<0.000000e+00> : vector<256x8xf32>
    %4 = tpu.matmul %2, %3, %cst_5 {dimension_numbers = #tpu.dot_dimension_numbers<[1], [0], [0], [1], [0, 0, 1, 1], [], []>} : vector<256x128xf32>, vector<128x8xf32>, vector<256x8xf32> -> vector<256x8xf32>
    %c0_6 = arith.constant 0 : index
    %c0_7 = arith.constant 0 : index
    %5 = vector.load %arg5[%c0_6, %c0_7] : memref<256x8xf32, #tpu.memory_space<vmem>>, vector<256x8xf32>
    tpu.vector_store %arg5[%c0_6, %c0_7], %4 {strides = array<i32>} : memref<256x8xf32, #tpu.memory_space<vmem>>, vector<256x8xf32>,
    %6 = arith.truncf %2 : vector<256x128xf32> to vector<256x128xbf16>
    %c0_8 = arith.constant 0 : index
    %c0_9 = arith.constant 0 : index
    %7 = vector.load %arg4[%c0_8, %c0_9] : memref<256x128xbf16, #tpu.memory_space<vmem>>, vector<256x128xbf16>
    tpu.vector_store %arg4[%c0_8, %c0_9], %6 {strides = array<i32>} : memref<256x128xbf16, #tpu.memory_space<vmem>>, vector<256x128xbf16>,
    return
  }
  func.func @transform_0(%arg0: i32) -> (i32, i32) {
    %c0_i32 = arith.constant 0 : i32
    %c0_i32_0 = arith.constant 0 : i32
    return %arg0, %c0_i32 : i32, i32
  }
  func.func @transform_1(%arg0: i32) -> (i32, i32) {
    %c0_i32 = arith.constant 0 : i32
    %c0_i32_0 = arith.constant 0 : i32
    %c0_i32_1 = arith.constant 0 : i32
    return %c0_i32, %c0_i32_0 : i32, i32
  }
  func.func @transform_2(%arg0: i32) -> (i32, i32) {
    %c0_i32 = arith.constant 0 : i32
    %c0_i32_0 = arith.constant 0 : i32
    %c0_i32_1 = arith.constant 0 : i32
    return %c0_i32, %c0_i32_0 : i32, i32
  }
  func.func @transform_3(%arg0: i32) -> (i32, i32) {
    %c0_i32 = arith.constant 0 : i32
    %c0_i32_0 = arith.constant 0 : i32
    return %arg0, %c0_i32 : i32, i32
  }
  func.func @transform_4(%arg0: i32) -> (i32, i32) {
    %c0_i32 = arith.constant 0 : i32
    %c0_i32_0 = arith.constant 0 : i32
    return %arg0, %c0_i32 : i32, i32
  }
}

</mosaic_0001>

<llo_original>
// kernel: tpu_custom_call.1
$region0: #{tpu_custom_call.1}
  #allocation0 [shape = 'u32[]', space=smem, size = 0x4, offset = 0x4, fixed_abs, tag = 'smem constant byte address 0x4 - core index']
  #allocation1 [shape = 'u32[144,128]{1,0:T(1,128)}', space=vmem, size = 0x12000, scoped, tag = 'internal scratch']
  %s0 = inlined_call_operand.vmem [shape: f32[512,64], index: 0, kind: input, shape index: {}]
  %s1 = inlined_call_operand.vmem [shape: f32[64,128], index: 1, kind: input, shape index: {}]
  %s2 = inlined_call_operand.vmem [shape: f32[128,8], index: 2, kind: input, shape index: {}]
  %s3 = inlined_call_operand.hbm [shape: bf16[512,128], index: 3, kind: output, shape index: {0}]
  %s4 = inlined_call_operand.vmem [shape: f32[512,8], index: 4, kind: output, shape index: {1}]
  %5 = xla_tuple %s3, %s4
  %s6 = sld [smem:[#allocation0]]
  $region53: #{tpu_custom_call.1} parent=0
    _
  %s8 = ssub.s32 1, %s6
  %s9 = scalar_select 0, %s8, %s6
  $region1: #{tpu_custom_call.1} parent=0
    #allocation2 [shape = 'u8[131072]{0}', space=vmem, size = 0x20000, scoped, tag = 'output window, operand 0']
    #allocation3 [shape = 's32[2]{0}', space=sflag, size = 0x8, scoped, tag = 'scoped memory for tpu_custom_call.1']
    %10 = vsyncpa [#allocation3], 0
    %s11 = scalar_lea.sflag [#allocation3], 1
    %12 = vsyncpa %s11, 0
    loop: start=0, step=1, limit=4
    $region2: #{tpu_custom_call.1} parent=1 // loop_pre_header
      _
    $region3: #{tpu_custom_call.1} parent=1 // loop_header
      %s14 = sphi 0, %s18
      %p15 = scmp.ge.s32.totalorder %s14, 4
      %s24 = sphi 0, %s26
      %s27 = sphi 0, %s24
      %s28 = sphi 0, %s27
      %s44 = sphi 0, %s28
      %s48 = sphi 0, %s48
      %s50 = sphi 0, %s48
      %s51 = sphi 0, %s50
      %s65 = sphi 0, %s51
      %s69 = sphi 0, %s69
      %s71 = sphi 0, %s69
      %s72 = sphi 0, %s71
      %s86 = sphi 0, %s72
      %s92 = sphi 0, %s94
      %s95 = sphi 0, %s92
      %s96 = sphi 0, %s95
      %s112 = sphi 0, %s96
      %s118 = sphi 0, %s120
      %s121 = sphi 0, %s118
      %s122 = sphi 0, %s121
      %s138 = sphi 0, %s122
    $region4: #{tpu_custom_call.1} parent=1 // loop_header_branch
      %17 = sbr.rel (%p15) target = $region8
    $region5: #{tpu_custom_call.1} parent=1 // loop_body
      %s19 = ssub.s32 %s14, 1
      %s20 = ssub.s32 %s14, 2
      %s21 = sadd.s32 %s14, 1
      %s22 = ssub.s32 %s14, %s21
      %p23 = scmp.eq.s32.totalorder %s22, 0
      %s25 = sadd.s32 %s24, 1
      %s26 = scalar_select %p23, %s24, %s25
      %p29 = pneg %p23
      %p30 = scmp.eq.s32.totalorder %s14, 1
      %p31 = por %p29, %p30
      %p32 = scmp.ne.s32.totalorder %s24, %s27
      %p33 = scmp.eq.s32.totalorder %s14, 0
      %p34 = por %p32, %p33
      %p35 = scmp.ne.s32.totalorder %s24, %s27
      %p36 = scmp.eq.s32.totalorder %s19, 1
      %p37 = por %p35, %p36
      %p38 = scmp.ne.s32.totalorder %s27, %s28
      %p39 = scmp.eq.s32.totalorder %s19, 0
      %p40 = por %p38, %p39
      %p41 = scmp.ne.s32.totalorder %s27, %s28
      %p42 = scmp.eq.s32.totalorder %s20, 1
      %p43 = por %p41, %p42
      %p45 = scmp.ne.s32.totalorder %s28, %s44
      %p46 = scmp.eq.s32.totalorder %s20, 0
      %p47 = por %p45, %p46
      %s49 = sadd.s32 %s48, 1
      %p52 = scmp.eq.s32.totalorder %s14, 1
      %p53 = scmp.ne.s32.totalorder %s48, %s50
      %p54 = scmp.eq.s32.totalorder %s14, 0
      %p55 = por %p53, %p54
      %p56 = scmp.ne.s32.totalorder %s48, %s50
      %p57 = scmp.eq.s32.totalorder %s19, 1
      %p58 = por %p56, %p57
      %p59 = scmp.ne.s32.totalorder %s50, %s51
      %p60 = scmp.eq.s32.totalorder %s19, 0
      %p61 = por %p59, %p60
      %p62 = scmp.ne.s32.totalorder %s50, %s51
      %p63 = scmp.eq.s32.totalorder %s20, 1
      %p64 = por %p62, %p63
      %p66 = scmp.ne.s32.totalorder %s51, %s65
      %p67 = scmp.eq.s32.totalorder %s20, 0
      %p68 = por %p66, %p67
      %s70 = sadd.s32 %s69, 1
      %p73 = scmp.eq.s32.totalorder %s14, 1
      %p74 = scmp.ne.s32.totalorder %s69, %s71
      %p75 = scmp.eq.s32.totalorder %s14, 0
      %p76 = por %p74, %p75
      %p77 = scmp.ne.s32.totalorder %s69, %s71
      %p78 = scmp.eq.s32.totalorder %s19, 1
      %p79 = por %p77, %p78
      %p80 = scmp.ne.s32.totalorder %s71, %s72
      %p81 = scmp.eq.s32.totalorder %s19, 0
      %p82 = por %p80, %p81
      %p83 = scmp.ne.s32.totalorder %s71, %s72
      %p84 = scmp.eq.s32.totalorder %s20, 1
      %p85 = por %p83, %p84
      %p87 = scmp.ne.s32.totalorder %s72, %s86
      %p88 = scmp.eq.s32.totalorder %s20, 0
      %p89 = por %p87, %p88
      %s90 = ssub.s32 %s14, %s21
      %p91 = scmp.eq.s32.totalorder %s90, 0
      %s93 = sadd.s32 %s92, 1
      %s94 = scalar_select %p91, %s92, %s93
      %p97 = pneg %p91
      %p98 = scmp.eq.s32.totalorder %s14, 1
      %p99 = por %p97, %p98
      %p100 = scmp.ne.s32.totalorder %s92, %s95
      %p101 = scmp.eq.s32.totalorder %s14, 0
      %p102 = por %p100, %p101
      %p103 = scmp.ne.s32.totalorder %s92, %s95
      %p104 = scmp.eq.s32.totalorder %s19, 1
      %p105 = por %p103, %p104
      %p106 = scmp.ne.s32.totalorder %s95, %s96
      %p107 = scmp.eq.s32.totalorder %s19, 0
      %p108 = por %p106, %p107
      %p109 = scmp.ne.s32.totalorder %s95, %s96
      %p110 = scmp.eq.s32.totalorder %s20, 1
      %p111 = por %p109, %p110
      %p113 = scmp.ne.s32.totalorder %s96, %s112
      %p114 = scmp.eq.s32.totalorder %s20, 0
      %p115 = por %p113, %p114
      %s116 = ssub.s32 %s14, %s21
      %p117 = scmp.eq.s32.totalorder %s116, 0
      %s119 = sadd.s32 %s118, 1
      %s120 = scalar_select %p117, %s118, %s119
      %p123 = pneg %p117
      %p124 = scmp.eq.s32.totalorder %s14, 1
      %p125 = por %p123, %p124
      %p126 = scmp.ne.s32.totalorder %s118, %s121
      %p127 = scmp.eq.s32.totalorder %s14, 0
      %p128 = por %p126, %p127
      %p129 = scmp.ne.s32.totalorder %s118, %s121
      %p130 = scmp.eq.s32.totalorder %s19, 1
      %p131 = por %p129, %p130
      %p132 = scmp.ne.s32.totalorder %s121, %s122
      %p133 = scmp.eq.s32.totalorder %s19, 0
      %p134 = por %p132, %p133
      %p135 = scmp.ne.s32.totalorder %s121, %s122
      %p136 = scmp.eq.s32.totalorder %s20, 1
      %p137 = por %p135, %p136
      %p139 = scmp.ne.s32.totalorder %s122, %s138
      %p140 = scmp.eq.s32.totalorder %s20, 0
      %p141 = por %p139, %p140
      %p142 = scmp.le.s32.totalorder 1, %s14
      %p143 = scmp.lt.s32.totalorder %s14, 3
      %p144 = pnand %p142, %p143
      %p145 = pneg %p144
      // Predicated region
      $region9: #{tpu_custom_call.1} parent=5 // pred_check
        _
      $region10: #{tpu_custom_call.1} parent=5 // pred_check_branch
        %147 = sbr.rel (%p144) target = $region12
      $region11: #{tpu_custom_call.1} parent=5 // pred_region
        %s148 = ssub.s32 %s14, 1
        // Predicated region
        $region13: #{tpu_custom_call.1} parent=11 // pred_check
          %p149 = pneg %p61
        $region14: #{tpu_custom_call.1} parent=11 // pred_check_branch
          %151 = sbr.rel (%p149) target = $region16
        $region15: #{tpu_custom_call.1} parent=11 // pred_region
          _
        $region16: #{tpu_custom_call.1} parent=11 // pred_fallthru
          _
        // Predicated region
        $region17: #{tpu_custom_call.1} parent=11 // pred_check
          %p152 = pneg %p82
        $region18: #{tpu_custom_call.1} parent=11 // pred_check_branch
          %154 = sbr.rel (%p152) target = $region20
        $region19: #{tpu_custom_call.1} parent=11 // pred_region
          _
        $region20: #{tpu_custom_call.1} parent=11 // pred_fallthru
          _
      $region12: #{tpu_custom_call.1} parent=5 // pred_fallthru
        _
      %p155 = scmp.lt.s32.totalorder %s14, 2
      // Predicated region
      $region21: #{tpu_custom_call.1} parent=5 // pred_check
        %p156 = pneg %p155
      $region22: #{tpu_custom_call.1} parent=5 // pred_check_branch
        %158 = sbr.rel (%p156) target = $region24
      $region23: #{tpu_custom_call.1} parent=5 // pred_region
        // Predicated region
        $region25: #{tpu_custom_call.1} parent=23 // pred_check
          %p159 = pneg %p34
        $region26: #{tpu_custom_call.1} parent=23 // pred_check_branch
          %161 = sbr.rel (%p159) target = $region28
        $region27: #{tpu_custom_call.1} parent=23 // pred_region
          %s162 = smul.u32 32, %s14
          %p163 = scmp.lt.s32.totalorder %s162, 63
          %s164 = scalar_select %p163, %s162, 63
          %s165 = smul.addr %s164, 8
          %s166 = scalar_lea.vmem %s0, %s165
          %s167 = smul.u32 32, %s14
        $region28: #{tpu_custom_call.1} parent=23 // pred_fallthru
          _
      $region24: #{tpu_custom_call.1} parent=5 // pred_fallthru
        _
      %p168 = scmp.le.s32.totalorder 1, %s14
      %p169 = scmp.lt.s32.totalorder %s14, 3
      %p170 = pnand %p168, %p169
      %p171 = pneg %p170
      // Predicated region
      $region29: #{tpu_custom_call.1} parent=5 // pred_check
        _
      $region30: #{tpu_custom_call.1} parent=5 // pred_check_branch
        %173 = sbr.rel (%p170) target = $region32
      $region31: #{tpu_custom_call.1} parent=5 // pred_region
        %s174 = ssub.s32 %s14, 1
        %s175 = smul.u32 32, %s19
        %p176 = scmp.lt.s32.totalorder %s175, 63
        %s177 = scalar_select %p176, %s175, 63
        %s178 = smul.addr %s177, 8
        %s179 = scalar_lea.vmem %s0, %s178
        %p180 = pneg %p40
        %p181 = pneg %p37
        %p182 = pneg %p61
        %p183 = pneg %p58
        %p184 = pneg %p82
        %p185 = pneg %p79
        %p186 = pneg %p108
        %p187 = pneg %p105
        %s188 = sand.u32 %s95, 1
        %s189 = scalar_lea.sflag [#allocation3], %s188
        %s190 = sand.u32 %s95, 1
        %s191 = smul.addr %s190, 128
        %s192 = scalar_lea.vmem [#allocation2], %s191
        %p193 = pneg %p134
        %p194 = pneg %p131
        %s195 = smul.u32 32, %s19
        %p196 = scmp.lt.s32.totalorder %s195, 63
        %s197 = scalar_select %p196, %s195, 63
        %s198 = smul.addr %s197, 8
        %s199 = scalar_lea.vmem %s4, %s198
        %s200 = smul.u32 32, %s19
        %p201 = scmp.lt.s32.totalorder %s200, 63
        %s202 = scalar_select %p201, %s200, 63
        %s203 = smul.addr %s202, 8
        %s204 = scalar_lea.vmem %s0, %s203
        %s205 = smul.u32 32, %s19
        %s206 = smul.u32 32, %s19
        %s207 = smul.u32 32, %s19
        %p208 = scmp.lt.s32.totalorder %s207, 63
        %s209 = scalar_select %p208, %s207, 63
        %s210 = smul.addr %s209, 8
        %s211 = scalar_lea.vmem %s4, %s210
        %s212 = smul.u32 32, %s19
        %v213 = vld [vmem:[%s204] sm:$0xff]
        %v214 = vld [vmem:[%s204 + $0x8] sm:$0xff]
        %v215 = vld [vmem:[%s204 + $0x10] sm:$0xff]
        %v216 = vld [vmem:[%s204 + $0x18] sm:$0xff]
        %v217 = vld [vmem:[%s204 + $0x20] sm:$0xff]
        %v218 = vld [vmem:[%s204 + $0x28] sm:$0xff]
        %v219 = vld [vmem:[%s204 + $0x30] sm:$0xff]
        %v220 = vld [vmem:[%s204 + $0x38] sm:$0xff]
        %v221 = vld [vmem:[%s204 + $0x40] sm:$0xff]
        %v222 = vld [vmem:[%s204 + $0x48] sm:$0xff]
        %v223 = vld [vmem:[%s204 + $0x50] sm:$0xff]
        %v224 = vld [vmem:[%s204 + $0x58] sm:$0xff]
        %v225 = vld [vmem:[%s204 + $0x60] sm:$0xff]
        %v226 = vld [vmem:[%s204 + $0x68] sm:$0xff]
        %v227 = vld [vmem:[%s204 + $0x70] sm:$0xff]
        %v228 = vld [vmem:[%s204 + $0x78] sm:$0xff]
        %v229 = vld [vmem:[%s204 + $0x80] sm:$0xff]
        %v230 = vld [vmem:[%s204 + $0x88] sm:$0xff]
        %v231 = vld [vmem:[%s204 + $0x90] sm:$0xff]
        %v232 = vld [vmem:[%s204 + $0x98] sm:$0xff]
        %v233 = vld [vmem:[%s204 + $0xa0] sm:$0xff]
        %v234 = vld [vmem:[%s204 + $0xa8] sm:$0xff]
        %v235 = vld [vmem:[%s204 + $0xb0] sm:$0xff]
        %v236 = vld [vmem:[%s204 + $0xb8] sm:$0xff]
        %v237 = vld [vmem:[%s204 + $0xc0] sm:$0xff]
        %v238 = vld [vmem:[%s204 + $0xc8] sm:$0xff]
        %v239 = vld [vmem:[%s204 + $0xd0] sm:$0xff]
        %v240 = vld [vmem:[%s204 + $0xd8] sm:$0xff]
        %v241 = vld [vmem:[%s204 + $0xe0] sm:$0xff]
        %v242 = vld [vmem:[%s204 + $0xe8] sm:$0xff]
        %v243 = vld [vmem:[%s204 + $0xf0] sm:$0xff]
        %v244 = vld [vmem:[%s204 + $0xf8] sm:$0xff]
        %v245 = vld [vmem:[%s1] sm:$0xff]
        %v246 = vld [vmem:[%s1 + $0x8] sm:$0xff]
        %v247 = vld [vmem:[%s1 + $0x10] sm:$0xff]
        %v248 = vld [vmem:[%s1 + $0x18] sm:$0xff]
        %v249 = vld [vmem:[%s1 + $0x20] sm:$0xff]
        %v250 = vld [vmem:[%s1 + $0x28] sm:$0xff]
        %v251 = vld [vmem:[%s1 + $0x30] sm:$0xff]
        %v252 = vld [vmem:[%s1 + $0x38] sm:$0xff]
        %vm253 = vcmask 523264
        %v255 = vsel %vm253, %v213, 0
        %v258 = vsel %vm253, %v214, 0
        %v261 = vsel %vm253, %v215, 0
        %v264 = vsel %vm253, %v216, 0
        %v267 = vsel %vm253, %v217, 0
        %v270 = vsel %vm253, %v218, 0
        %v273 = vsel %vm253, %v219, 0
        %v276 = vsel %vm253, %v220, 0
        %v279 = vsel %vm253, %v221, 0
        %v282 = vsel %vm253, %v222, 0
        %v285 = vsel %vm253, %v223, 0
        %v288 = vsel %vm253, %v224, 0
        %v291 = vsel %vm253, %v225, 0
        %v294 = vsel %vm253, %v226, 0
        %v297 = vsel %vm253, %v227, 0
        %v300 = vsel %vm253, %v228, 0
        %v303 = vsel %vm253, %v229, 0
        %v306 = vsel %vm253, %v230, 0
        %v309 = vsel %vm253, %v231, 0
        %v312 = vsel %vm253, %v232, 0
        %v315 = vsel %vm253, %v233, 0
        %v318 = vsel %vm253, %v234, 0
        %v321 = vsel %vm253, %v235, 0
        %v324 = vsel %vm253, %v236, 0
        %v327 = vsel %vm253, %v237, 0
        %v330 = vsel %vm253, %v238, 0
        %v333 = vsel %vm253, %v239, 0
        %v336 = vsel %vm253, %v240, 0
        %v339 = vsel %vm253, %v241, 0
        %v342 = vsel %vm253, %v242, 0
        %v345 = vsel %vm253, %v243, 0
        %v348 = vsel %vm253, %v244, 0
        %350 = vmatprep.subr.mxu0 0.0
        %351 = vmatpush1.msra.mxu0 %v245
        %352 = vmatprep.subr.mxu0 0.0
        %353 = vmatpush1.msra.mxu0 %v246
        %354 = vmatprep.subr.mxu0 0.0
        %355 = vmatpush1.msra.mxu0 %v247
        %356 = vmatprep.subr.mxu0 0.0
        %357 = vmatpush1.msra.mxu0 %v248
        %358 = vmatprep.subr.mxu0 0.0
        %359 = vmatpush1.msra.mxu0 %v249
        %360 = vmatprep.subr.mxu0 0.0
        %361 = vmatpush1.msra.mxu0 %v250
        %362 = vmatprep.subr.mxu0 0.0
        %363 = vmatpush1.msra.mxu0 %v251
        %364 = vmatprep.subr.mxu0 0.0
        %365 = vmatpush1.msra.mxu0 %v252
        %366 = vmatprep.subr.mxu0 0.0
        %367 = vmatpush1.msra.mxu0 0.0
        %368 = vmatprep.subr.mxu0 0.0
        %369 = vmatpush1.msra.mxu0 0.0
        %370 = vmatprep.subr.mxu0 0.0
        %371 = vmatpush1.msra.mxu0 0.0
        %372 = vmatprep.subr.mxu0 0.0
        %373 = vmatpush1.msra.mxu0 0.0
        %374 = vmatprep.subr.mxu0 0.0
        %375 = vmatpush1.msra.mxu0 0.0
        %376 = vmatprep.subr.mxu0 0.0
        %377 = vmatpush1.msra.mxu0 0.0
        %378 = vmatprep.subr.mxu0 0.0
        %379 = vmatpush1.msra.mxu0 0.0
        %380 = vmatprep.subr.mxu0 0.0
        %381 = vmatpush1.msra.mxu0 0.0
        %382 = vmatprep.subr.mxu0 0.0
        %383 = vmatpush1.msra.mxu0 0.0
        %384 = vmatprep.subr.mxu0 0.0
        %385 = vmatpush1.msra.mxu0 0.0
        %386 = vmatprep.subr.mxu0 0.0
        %387 = vmatpush1.msra.mxu0 0.0
        %388 = vmatprep.subr.mxu0 0.0
        %389 = vmatpush1.msra.mxu0 0.0
        %390 = vmatprep.subr.mxu0 0.0
        %391 = vmatpush1.msra.mxu0 0.0
        %392 = vmatprep.subr.mxu0 0.0
        %393 = vmatpush1.msra.mxu0 0.0
        %394 = vmatprep.subr.mxu0 0.0
        %395 = vmatpush1.msra.mxu0 0.0
        %396 = vmatprep.subr.mxu0 0.0
        %397 = vmatpush1.msra.mxu0 0.0
        %398 = vmatprep.subr.mxu0 0.0
        %399 = vmatpush1.msra.mxu0 0.0
        %400 = vmatprep.subr.mxu0 0.0
        %401 = vmatpush1.msra.mxu0 0.0
        %402 = vmatprep.subr.mxu0 0.0
        %403 = vmatpush1.msra.mxu0 0.0
        %404 = vmatprep.subr.mxu0 0.0
        %405 = vmatpush1.msra.mxu0 0.0
        %406 = vmatprep.subr.mxu0 0.0
        %407 = vmatpush1.msra.mxu0 0.0
        %408 = vmatprep.subr.mxu0 0.0
        %409 = vmatpush1.msra.mxu0 0.0
        %410 = vmatprep.subr.mxu0 0.0
        %411 = vmatpush1.msra.mxu0 0.0
        %412 = vmatprep.subr.mxu0 0.0
        %413 = vmatpush1.msra.mxu0 0.0
        %414 = vmatprep.mubr.f32.mxu0 0.0
        %415 = vmatmul.mubr.f32.gmra.mrb[0].mxu0 %v255
        %v416 = vpop.f32.mrb[0].mxu0
        %v417 = vadd.f32 0.0, %v416
        %v418 = vpop.f32.mrb[0].mxu0
        %419 = vmatprep.mubr.f32.mxu0 0.0
        %420 = vmatmul.mubr.f32.gmra.mrb[0].mxu0 %v258
        %v421 = vpop.f32.mrb[0].mxu0
        %v422 = vadd.f32 0.0, %v421
        %v423 = vpop.f32.mrb[0].mxu0
        %424 = vmatprep.mubr.f32.mxu0 0.0
        %425 = vmatmul.mubr.f32.gmra.mrb[0].mxu0 %v261
        %v426 = vpop.f32.mrb[0].mxu0
        %v427 = vadd.f32 0.0, %v426
        %v428 = vpop.f32.mrb[0].mxu0
        %429 = vmatprep.mubr.f32.mxu0 0.0
        %430 = vmatmul.mubr.f32.gmra.mrb[0].mxu0 %v264
        %v431 = vpop.f32.mrb[0].mxu0
        %v432 = vadd.f32 0.0, %v431
        %v433 = vpop.f32.mrb[0].mxu0
        %434 = vmatprep.mubr.f32.mxu0 0.0
        %435 = vmatmul.mubr.f32.gmra.mrb[0].mxu0 %v267
        %v436 = vpop.f32.mrb[0].mxu0
        %v437 = vadd.f32 0.0, %v436
        %v438 = vpop.f32.mrb[0].mxu0
        %439 = vmatprep.mubr.f32.mxu0 0.0
        %440 = vmatmul.mubr.f32.gmra.mrb[0].mxu0 %v270
        %v441 = vpop.f32.mrb[0].mxu0
        %v442 = vadd.f32 0.0, %v441
        %v443 = vpop.f32.mrb[0].mxu0
        %444 = vmatprep.mubr.f32.mxu0 0.0
        %445 = vmatmul.mubr.f32.gmra.mrb[0].mxu0 %v273
        %v446 = vpop.f32.mrb[0].mxu0
        %v447 = vadd.f32 0.0, %v446
        %v448 = vpop.f32.mrb[0].mxu0
        %449 = vmatprep.mubr.f32.mxu0 0.0
        %450 = vmatmul.mubr.f32.gmra.mrb[0].mxu0 %v276
        %v451 = vpop.f32.mrb[0].mxu0
        %v452 = vadd.f32 0.0, %v451
        %v453 = vpop.f32.mrb[0].mxu0
        %454 = vmatprep.mubr.f32.mxu0 0.0
        %455 = vmatmul.mubr.f32.gmra.mrb[0].mxu0 %v279
        %v456 = vpop.f32.mrb[0].mxu0
        %v457 = vadd.f32 0.0, %v456
        %v458 = vpop.f32.mrb[0].mxu0
        %459 = vmatprep.mubr.f32.mxu0 0.0
        %460 = vmatmul.mubr.f32.gmra.mrb[0].mxu0 %v282
        %v461 = vpop.f32.mrb[0].mxu0
        %v462 = vadd.f32 0.0, %v461
        %v463 = vpop.f32.mrb[0].mxu0
        %464 = vmatprep.mubr.f32.mxu0 0.0
        %465 = vmatmul.mubr.f32.gmra.mrb[0].mxu0 %v285
        %v466 = vpop.f32.mrb[0].mxu0
        %v467 = vadd.f32 0.0, %v466
        %v468 = vpop.f32.mrb[0].mxu0
        %469 = vmatprep.mubr.f32.mxu0 0.0
        %470 = vmatmul.mubr.f32.gmra.mrb[0].mxu0 %v288
        %v471 = vpop.f32.mrb[0].mxu0
        %v472 = vadd.f32 0.0, %v471
        %v473 = vpop.f32.mrb[0].mxu0
        %474 = vmatprep.mubr.f32.mxu0 0.0
        %475 = vmatmul.mubr.f32.gmra.mrb[0].mxu0 %v291
        %v476 = vpop.f32.mrb[0].mxu0
        %v477 = vadd.f32 0.0, %v476
        %v478 = vpop.f32.mrb[0].mxu0
        %479 = vmatprep.mubr.f32.mxu0 0.0
        %480 = vmatmul.mubr.f32.gmra.mrb[0].mxu0 %v294
        %v481 = vpop.f32.mrb[0].mxu0
        %v482 = vadd.f32 0.0, %v481
        %v483 = vpop.f32.mrb[0].mxu0
        %484 = vmatprep.mubr.f32.mxu0 0.0
        %485 = vmatmul.mubr.f32.gmra.mrb[0].mxu0 %v297
        %v486 = vpop.f32.mrb[0].mxu0
        %v487 = vadd.f32 0.0, %v486
        %v488 = vpop.f32.mrb[0].mxu0
        %489 = vmatprep.mubr.f32.mxu0 0.0
        %490 = vmatmul.mubr.f32.gmra.mrb[0].mxu0 %v300
        %v491 = vpop.f32.mrb[0].mxu0
        %v492 = vadd.f32 0.0, %v491
        %v493 = vpop.f32.mrb[0].mxu0
        %494 = vmatprep.mubr.f32.mxu0 0.0
        %495 = vmatmul.mubr.f32.gmra.mrb[0].mxu0 %v303
        %v496 = vpop.f32.mrb[0].mxu0
        %v497 = vadd.f32 0.0, %v496
        %v498 = vpop.f32.mrb[0].mxu0
        %499 = vmatprep.mubr.f32.mxu0 0.0
        %500 = vmatmul.mubr.f32.gmra.mrb[0].mxu0 %v306
        %v501 = vpop.f32.mrb[0].mxu0
        %v502 = vadd.f32 0.0, %v501
        %v503 = vpop.f32.mrb[0].mxu0
        %504 = vmatprep.mubr.f32.mxu0 0.0
        %505 = vmatmul.mubr.f32.gmra.mrb[0].mxu0 %v309
        %v506 = vpop.f32.mrb[0].mxu0
        %v507 = vadd.f32 0.0, %v506
        %v508 = vpop.f32.mrb[0].mxu0
        %509 = vmatprep.mubr.f32.mxu0 0.0
        %510 = vmatmul.mubr.f32.gmra.mrb[0].mxu0 %v312
        %v511 = vpop.f32.mrb[0].mxu0
        %v512 = vadd.f32 0.0, %v511
        %v513 = vpop.f32.mrb[0].mxu0
        %514 = vmatprep.mubr.f32.mxu0 0.0
        %515 = vmatmul.mubr.f32.gmra.mrb[0].mxu0 %v315
        %v516 = vpop.f32.mrb[0].mxu0
        %v517 = vadd.f32 0.0, %v516
        %v518 = vpop.f32.mrb[0].mxu0
        %519 = vmatprep.mubr.f32.mxu0 0.0
        %520 = vmatmul.mubr.f32.gmra.mrb[0].mxu0 %v318
        %v521 = vpop.f32.mrb[0].mxu0
        %v522 = vadd.f32 0.0, %v521
        %v523 = vpop.f32.mrb[0].mxu0
        %524 = vmatprep.mubr.f32.mxu0 0.0
        %525 = vmatmul.mubr.f32.gmra.mrb[0].mxu0 %v321
        %v526 = vpop.f32.mrb[0].mxu0
        %v527 = vadd.f32 0.0, %v526
        %v528 = vpop.f32.mrb[0].mxu0
        %529 = vmatprep.mubr.f32.mxu0 0.0
        %530 = vmatmul.mubr.f32.gmra.mrb[0].mxu0 %v324
        %v531 = vpop.f32.mrb[0].mxu0
        %v532 = vadd.f32 0.0, %v531
        %v533 = vpop.f32.mrb[0].mxu0
        %534 = vmatprep.mubr.f32.mxu0 0.0
        %535 = vmatmul.mubr.f32.gmra.mrb[0].mxu0 %v327
        %v536 = vpop.f32.mrb[0].mxu0
        %v537 = vadd.f32 0.0, %v536
        %v538 = vpop.f32.mrb[0].mxu0
        %539 = vmatprep.mubr.f32.mxu0 0.0
        %540 = vmatmul.mubr.f32.gmra.mrb[0].mxu0 %v330
        %v541 = vpop.f32.mrb[0].mxu0
        %v542 = vadd.f32 0.0, %v541
        %v543 = vpop.f32.mrb[0].mxu0
        %544 = vmatprep.mubr.f32.mxu0 0.0
        %545 = vmatmul.mubr.f32.gmra.mrb[0].mxu0 %v333
        %v546 = vpop.f32.mrb[0].mxu0
        %v547 = vadd.f32 0.0, %v546
        %v548 = vpop.f32.mrb[0].mxu0
        %549 = vmatprep.mubr.f32.mxu0 0.0
        %550 = vmatmul.mubr.f32.gmra.mrb[0].mxu0 %v336
        %v551 = vpop.f32.mrb[0].mxu0
        %v552 = vadd.f32 0.0, %v551
        %v553 = vpop.f32.mrb[0].mxu0
        %554 = vmatprep.mubr.f32.mxu0 0.0
        %555 = vmatmul.mubr.f32.gmra.mrb[0].mxu0 %v339
        %v556 = vpop.f32.mrb[0].mxu0
        %v557 = vadd.f32 0.0, %v556
        %v558 = vpop.f32.mrb[0].mxu0
        %559 = vmatprep.mubr.f32.mxu0 0.0
        %560 = vmatmul.mubr.f32.gmra.mrb[0].mxu0 %v342
        %v561 = vpop.f32.mrb[0].mxu0
        %v562 = vadd.f32 0.0, %v561
        %v563 = vpop.f32.mrb[0].mxu0
        %564 = vmatprep.mubr.f32.mxu0 0.0
        %565 = vmatmul.mubr.f32.gmra.mrb[0].mxu0 %v345
        %v566 = vpop.f32.mrb[0].mxu0
        %v567 = vadd.f32 0.0, %v566
        %v568 = vpop.f32.mrb[0].mxu0
        %569 = vmatprep.mubr.f32.mxu0 0.0
        %570 = vmatmul.mubr.f32.gmra.mrb[0].mxu0 %v348
        %v571 = vpop.f32.mrb[0].mxu0
        %v572 = vadd.f32 0.0, %v571
        %v573 = vpop.f32.mrb[0].mxu0
        %574 = vdwg.mxu0
        %v575 = vld [vmem:[%s2] sm:$0xff]
        %v576 = vld [vmem:[%s2 + $0x8] sm:$0xff]
        %v577 = vld [vmem:[%s2 + $0x10] sm:$0xff]
        %v578 = vld [vmem:[%s2 + $0x18] sm:$0xff]
        %v579 = vld [vmem:[%s2 + $0x20] sm:$0xff]
        %v580 = vld [vmem:[%s2 + $0x28] sm:$0xff]
        %v581 = vld [vmem:[%s2 + $0x30] sm:$0xff]
        %v582 = vld [vmem:[%s2 + $0x38] sm:$0xff]
        %v583 = vld [vmem:[%s2 + $0x40] sm:$0xff]
        %v584 = vld [vmem:[%s2 + $0x48] sm:$0xff]
        %v585 = vld [vmem:[%s2 + $0x50] sm:$0xff]
        %v586 = vld [vmem:[%s2 + $0x58] sm:$0xff]
        %v587 = vld [vmem:[%s2 + $0x60] sm:$0xff]
        %v588 = vld [vmem:[%s2 + $0x68] sm:$0xff]
        %v589 = vld [vmem:[%s2 + $0x70] sm:$0xff]
        %v590 = vld [vmem:[%s2 + $0x78] sm:$0xff]
        %591 = vmatprep.subr.mxu0 0.0
        %592 = vmatpush1.msra.mxu0 %v575
        %593 = vmatprep.subr.mxu0 0.0
        %594 = vmatpush1.msra.mxu0 %v576
        %595 = vmatprep.subr.mxu0 0.0
        %596 = vmatpush1.msra.mxu0 %v577
        %597 = vmatprep.subr.mxu0 0.0
        %598 = vmatpush1.msra.mxu0 %v578
        %599 = vmatprep.subr.mxu0 0.0
        %600 = vmatpush1.msra.mxu0 %v579
        %601 = vmatprep.subr.mxu0 0.0
        %602 = vmatpush1.msra.mxu0 %v580
        %603 = vmatprep.subr.mxu0 0.0
        %604 = vmatpush1.msra.mxu0 %v581
        %605 = vmatprep.subr.mxu0 0.0
        %606 = vmatpush1.msra.mxu0 %v582
        %607 = vmatprep.subr.mxu0 0.0
        %608 = vmatpush1.msra.mxu0 %v583
        %609 = vmatprep.subr.mxu0 0.0
        %610 = vmatpush1.msra.mxu0 %v584
        %611 = vmatprep.subr.mxu0 0.0
        %612 = vmatpush1.msra.mxu0 %v585
        %613 = vmatprep.subr.mxu0 0.0
        %614 = vmatpush1.msra.mxu0 %v586
        %615 = vmatprep.subr.mxu0 0.0
        %616 = vmatpush1.msra.mxu0 %v587
        %617 = vmatprep.subr.mxu0 0.0
        %618 = vmatpush1.msra.mxu0 %v588
        %619 = vmatprep.subr.mxu0 0.0
        %620 = vmatpush1.msra.mxu0 %v589
        %621 = vmatprep.subr.mxu0 0.0
        %622 = vmatpush1.msra.mxu0 %v590
        %623 = vmatprep.subr.mxu0 0.0
        %624 = vmatpush1.msra.mxu0 0.0
        %625 = vmatprep.subr.mxu0 0.0
        %626 = vmatpush1.msra.mxu0 0.0
        %627 = vmatprep.subr.mxu0 0.0
        %628 = vmatpush1.msra.mxu0 0.0
        %629 = vmatprep.subr.mxu0 0.0
        %630 = vmatpush1.msra.mxu0 0.0
        %631 = vmatprep.subr.mxu0 0.0
        %632 = vmatpush1.msra.mxu0 0.0
        %633 = vmatprep.subr.mxu0 0.0
        %634 = vmatpush1.msra.mxu0 0.0
        %635 = vmatprep.subr.mxu0 0.0
        %636 = vmatpush1.msra.mxu0 0.0
        %637 = vmatprep.subr.mxu0 0.0
        %638 = vmatpush1.msra.mxu0 0.0
        %639 = vmatprep.subr.mxu0 0.0
        %640 = vmatpush1.msra.mxu0 0.0
        %641 = vmatprep.subr.mxu0 0.0
        %642 = vmatpush1.msra.mxu0 0.0
        %643 = vmatprep.subr.mxu0 0.0
        %644 = vmatpush1.msra.mxu0 0.0
        %645 = vmatprep.subr.mxu0 0.0
        %646 = vmatpush1.msra.mxu0 0.0
        %647 = vmatprep.subr.mxu0 0.0
        %648 = vmatpush1.msra.mxu0 0.0
        %649 = vmatprep.subr.mxu0 0.0
        %650 = vmatpush1.msra.mxu0 0.0
        %651 = vmatprep.subr.mxu0 0.0
        %652 = vmatpush1.msra.mxu0 0.0
        %653 = vmatprep.subr.mxu0 0.0
        %654 = vmatpush1.msra.mxu0 0.0
        %655 = vmatprep.mubr.f32.mxu0 0.0
        %656 = vmatmul.mubr.f32.gmra.mrb[0].mxu0 %v417
        %v657 = vpop.f32.mrb[0].mxu0
        %v658 = vadd.f32 0.0, %v657
        %v659 = vpop.f32.mrb[0].mxu0
        %660 = vmatprep.mubr.f32.mxu0 0.0
        %661 = vmatmul.mubr.f32.gmra.mrb[0].mxu0 %v422
        %v662 = vpop.f32.mrb[0].mxu0
        %v663 = vadd.f32 0.0, %v662
        %v664 = vpop.f32.mrb[0].mxu0
        %665 = vmatprep.mubr.f32.mxu0 0.0
        %666 = vmatmul.mubr.f32.gmra.mrb[0].mxu0 %v427
        %v667 = vpop.f32.mrb[0].mxu0
        %v668 = vadd.f32 0.0, %v667
        %v669 = vpop.f32.mrb[0].mxu0
        %670 = vmatprep.mubr.f32.mxu0 0.0
        %671 = vmatmul.mubr.f32.gmra.mrb[0].mxu0 %v432
        %v672 = vpop.f32.mrb[0].mxu0
        %v673 = vadd.f32 0.0, %v672
        %v674 = vpop.f32.mrb[0].mxu0
        %675 = vmatprep.mubr.f32.mxu0 0.0
        %676 = vmatmul.mubr.f32.gmra.mrb[0].mxu0 %v437
        %v677 = vpop.f32.mrb[0].mxu0
        %v678 = vadd.f32 0.0, %v677
        %v679 = vpop.f32.mrb[0].mxu0
        %680 = vmatprep.mubr.f32.mxu0 0.0
        %681 = vmatmul.mubr.f32.gmra.mrb[0].mxu0 %v442
        %v682 = vpop.f32.mrb[0].mxu0
        %v683 = vadd.f32 0.0, %v682
        %v684 = vpop.f32.mrb[0].mxu0
        %685 = vmatprep.mubr.f32.mxu0 0.0
        %686 = vmatmul.mubr.f32.gmra.mrb[0].mxu0 %v447
        %v687 = vpop.f32.mrb[0].mxu0
        %v688 = vadd.f32 0.0, %v687
        %v689 = vpop.f32.mrb[0].mxu0
        %690 = vmatprep.mubr.f32.mxu0 0.0
        %691 = vmatmul.mubr.f32.gmra.mrb[0].mxu0 %v452
        %v692 = vpop.f32.mrb[0].mxu0
        %v693 = vadd.f32 0.0, %v692
        %v694 = vpop.f32.mrb[0].mxu0
        %695 = vmatprep.mubr.f32.mxu0 0.0
        %696 = vmatmul.mubr.f32.gmra.mrb[0].mxu0 %v457
        %v697 = vpop.f32.mrb[0].mxu0
        %v698 = vadd.f32 0.0, %v697
        %v699 = vpop.f32.mrb[0].mxu0
        %700 = vmatprep.mubr.f32.mxu0 0.0
        %701 = vmatmul.mubr.f32.gmra.mrb[0].mxu0 %v462
        %v702 = vpop.f32.mrb[0].mxu0
        %v703 = vadd.f32 0.0, %v702
        %v704 = vpop.f32.mrb[0].mxu0
        %705 = vmatprep.mubr.f32.mxu0 0.0
        %706 = vmatmul.mubr.f32.gmra.mrb[0].mxu0 %v467
        %v707 = vpop.f32.mrb[0].mxu0
        %v708 = vadd.f32 0.0, %v707
        %v709 = vpop.f32.mrb[0].mxu0
        %710 = vmatprep.mubr.f32.mxu0 0.0
        %711 = vmatmul.mubr.f32.gmra.mrb[0].mxu0 %v472
        %v712 = vpop.f32.mrb[0].mxu0
        %v713 = vadd.f32 0.0, %v712
        %v714 = vpop.f32.mrb[0].mxu0
        %715 = vmatprep.mubr.f32.mxu0 0.0
        %716 = vmatmul.mubr.f32.gmra.mrb[0].mxu0 %v477
        %v717 = vpop.f32.mrb[0].mxu0
        %v718 = vadd.f32 0.0, %v717
        %v719 = vpop.f32.mrb[0].mxu0
        %720 = vmatprep.mubr.f32.mxu0 0.0
        %721 = vmatmul.mubr.f32.gmra.mrb[0].mxu0 %v482
        %v722 = vpop.f32.mrb[0].mxu0
        %v723 = vadd.f32 0.0, %v722
        %v724 = vpop.f32.mrb[0].mxu0
        %725 = vmatprep.mubr.f32.mxu0 0.0
        %726 = vmatmul.mubr.f32.gmra.mrb[0].mxu0 %v487
        %v727 = vpop.f32.mrb[0].mxu0
        %v728 = vadd.f32 0.0, %v727
        %v729 = vpop.f32.mrb[0].mxu0
        %730 = vmatprep.mubr.f32.mxu0 0.0
        %731 = vmatmul.mubr.f32.gmra.mrb[0].mxu0 %v492
        %v732 = vpop.f32.mrb[0].mxu0
        %v733 = vadd.f32 0.0, %v732
        %v734 = vpop.f32.mrb[0].mxu0
        %735 = vmatprep.mubr.f32.mxu0 0.0
        %736 = vmatmul.mubr.f32.gmra.mrb[0].mxu0 %v497
        %v737 = vpop.f32.mrb[0].mxu0
        %v738 = vadd.f32 0.0, %v737
        %v739 = vpop.f32.mrb[0].mxu0
        %740 = vmatprep.mubr.f32.mxu0 0.0
        %741 = vmatmul.mubr.f32.gmra.mrb[0].mxu0 %v502
        %v742 = vpop.f32.mrb[0].mxu0
        %v743 = vadd.f32 0.0, %v742
        %v744 = vpop.f32.mrb[0].mxu0
        %745 = vmatprep.mubr.f32.mxu0 0.0
        %746 = vmatmul.mubr.f32.gmra.mrb[0].mxu0 %v507
        %v747 = vpop.f32.mrb[0].mxu0
        %v748 = vadd.f32 0.0, %v747
        %v749 = vpop.f32.mrb[0].mxu0
        %750 = vmatprep.mubr.f32.mxu0 0.0
        %751 = vmatmul.mubr.f32.gmra.mrb[0].mxu0 %v512
        %v752 = vpop.f32.mrb[0].mxu0
        %v753 = vadd.f32 0.0, %v752
        %v754 = vpop.f32.mrb[0].mxu0
        %755 = vmatprep.mubr.f32.mxu0 0.0
        %756 = vmatmul.mubr.f32.gmra.mrb[0].mxu0 %v517
        %v757 = vpop.f32.mrb[0].mxu0
        %v758 = vadd.f32 0.0, %v757
        %v759 = vpop.f32.mrb[0].mxu0
        %760 = vmatprep.mubr.f32.mxu0 0.0
        %761 = vmatmul.mubr.f32.gmra.mrb[0].mxu0 %v522
        %v762 = vpop.f32.mrb[0].mxu0
        %v763 = vadd.f32 0.0, %v762
        %v764 = vpop.f32.mrb[0].mxu0
        %765 = vmatprep.mubr.f32.mxu0 0.0
        %766 = vmatmul.mubr.f32.gmra.mrb[0].mxu0 %v527
        %v767 = vpop.f32.mrb[0].mxu0
        %v768 = vadd.f32 0.0, %v767
        %v769 = vpop.f32.mrb[0].mxu0
        %770 = vmatprep.mubr.f32.mxu0 0.0
        %771 = vmatmul.mubr.f32.gmra.mrb[0].mxu0 %v532
        %v772 = vpop.f32.mrb[0].mxu0
        %v773 = vadd.f32 0.0, %v772
        %v774 = vpop.f32.mrb[0].mxu0
        %775 = vmatprep.mubr.f32.mxu0 0.0
        %776 = vmatmul.mubr.f32.gmra.mrb[0].mxu0 %v537
        %v777 = vpop.f32.mrb[0].mxu0
        %v778 = vadd.f32 0.0, %v777
        %v779 = vpop.f32.mrb[0].mxu0
        %780 = vmatprep.mubr.f32.mxu0 0.0
        %781 = vmatmul.mubr.f32.gmra.mrb[0].mxu0 %v542
        %v782 = vpop.f32.mrb[0].mxu0
        %v783 = vadd.f32 0.0, %v782
        %v784 = vpop.f32.mrb[0].mxu0
        %785 = vmatprep.mubr.f32.mxu0 0.0
        %786 = vmatmul.mubr.f32.gmra.mrb[0].mxu0 %v547
        %v787 = vpop.f32.mrb[0].mxu0
        %v788 = vadd.f32 0.0, %v787
        %v789 = vpop.f32.mrb[0].mxu0
        %790 = vmatprep.mubr.f32.mxu0 0.0
        %791 = vmatmul.mubr.f32.gmra.mrb[0].mxu0 %v552
        %v792 = vpop.f32.mrb[0].mxu0
        %v793 = vadd.f32 0.0, %v792
        %v794 = vpop.f32.mrb[0].mxu0
        %795 = vmatprep.mubr.f32.mxu0 0.0
        %796 = vmatmul.mubr.f32.gmra.mrb[0].mxu0 %v557
        %v797 = vpop.f32.mrb[0].mxu0
        %v798 = vadd.f32 0.0, %v797
        %v799 = vpop.f32.mrb[0].mxu0
        %800 = vmatprep.mubr.f32.mxu0 0.0
        %801 = vmatmul.mubr.f32.gmra.mrb[0].mxu0 %v562
        %v802 = vpop.f32.mrb[0].mxu0
        %v803 = vadd.f32 0.0, %v802
        %v804 = vpop.f32.mrb[0].mxu0
        %805 = vmatprep.mubr.f32.mxu0 0.0
        %806 = vmatmul.mubr.f32.gmra.mrb[0].mxu0 %v567
        %v807 = vpop.f32.mrb[0].mxu0
        %v808 = vadd.f32 0.0, %v807
        %v809 = vpop.f32.mrb[0].mxu0
        %810 = vmatprep.mubr.f32.mxu0 0.0
        %811 = vmatmul.mubr.f32.gmra.mrb[0].mxu0 %v572
        %v812 = vpop.f32.mrb[0].mxu0
        %v813 = vadd.f32 0.0, %v812
        %v814 = vpop.f32.mrb[0].mxu0
        %815 = vdwg.mxu0
        %vm816 = vcmask 64512
        %817 = vst.msk [vmem:[%s211] sm:$0xff] %vm816, %v658
        %818 = vst.msk [vmem:[%s211 + $0x8] sm:$0xff] %vm816, %v663
        %819 = vst.msk [vmem:[%s211 + $0x10] sm:$0xff] %vm816, %v668
        %820 = vst.msk [vmem:[%s211 + $0x18] sm:$0xff] %vm816, %v673
        %821 = vst.msk [vmem:[%s211 + $0x20] sm:$0xff] %vm816, %v678
        %822 = vst.msk [vmem:[%s211 + $0x28] sm:$0xff] %vm816, %v683
        %823 = vst.msk [vmem:[%s211 + $0x30] sm:$0xff] %vm816, %v688
        %824 = vst.msk [vmem:[%s211 + $0x38] sm:$0xff] %vm816, %v693
        %825 = vst.msk [vmem:[%s211 + $0x40] sm:$0xff] %vm816, %v698
        %826 = vst.msk [vmem:[%s211 + $0x48] sm:$0xff] %vm816, %v703
        %827 = vst.msk [vmem:[%s211 + $0x50] sm:$0xff] %vm816, %v708
        %828 = vst.msk [vmem:[%s211 + $0x58] sm:$0xff] %vm816, %v713
        %829 = vst.msk [vmem:[%s211 + $0x60] sm:$0xff] %vm816, %v718
        %830 = vst.msk [vmem:[%s211 + $0x68] sm:$0xff] %vm816, %v723
        %831 = vst.msk [vmem:[%s211 + $0x70] sm:$0xff] %vm816, %v728
        %832 = vst.msk [vmem:[%s211 + $0x78] sm:$0xff] %vm816, %v733
        %833 = vst.msk [vmem:[%s211 + $0x80] sm:$0xff] %vm816, %v738
        %834 = vst.msk [vmem:[%s211 + $0x88] sm:$0xff] %vm816, %v743
        %835 = vst.msk [vmem:[%s211 + $0x90] sm:$0xff] %vm816, %v748
        %836 = vst.msk [vmem:[%s211 + $0x98] sm:$0xff] %vm816, %v753
        %837 = vst.msk [vmem:[%s211 + $0xa0] sm:$0xff] %vm816, %v758
        %838 = vst.msk [vmem:[%s211 + $0xa8] sm:$0xff] %vm816, %v763
        %839 = vst.msk [vmem:[%s211 + $0xb0] sm:$0xff] %vm816, %v768
        %840 = vst.msk [vmem:[%s211 + $0xb8] sm:$0xff] %vm816, %v773
        %841 = vst.msk [vmem:[%s211 + $0xc0] sm:$0xff] %vm816, %v778
        %842 = vst.msk [vmem:[%s211 + $0xc8] sm:$0xff] %vm816, %v783
        %843 = vst.msk [vmem:[%s211 + $0xd0] sm:$0xff] %vm816, %v788
        %844 = vst.msk [vmem:[%s211 + $0xd8] sm:$0xff] %vm816, %v793
        %845 = vst.msk [vmem:[%s211 + $0xe0] sm:$0xff] %vm816, %v798
        %846 = vst.msk [vmem:[%s211 + $0xe8] sm:$0xff] %vm816, %v803
        %847 = vst.msk [vmem:[%s211 + $0xf0] sm:$0xff] %vm816, %v808
        %848 = vst.msk [vmem:[%s211 + $0xf8] sm:$0xff] %vm816, %v813
        %v849 = vpack.c.bf16 %v422, %v417
        %v850 = vpack.c.bf16 %v432, %v427
        %v851 = vpack.c.bf16 %v442, %v437
        %v852 = vpack.c.bf16 %v452, %v447
        %v853 = vpack.c.bf16 %v462, %v457
        %v854 = vpack.c.bf16 %v472, %v467
        %v855 = vpack.c.bf16 %v482, %v477
        %v856 = vpack.c.bf16 %v492, %v487
        %v857 = vpack.c.bf16 %v502, %v497
        %v858 = vpack.c.bf16 %v512, %v507
        %v859 = vpack.c.bf16 %v522, %v517
        %v860 = vpack.c.bf16 %v532, %v527
        %v861 = vpack.c.bf16 %v542, %v537
        %v862 = vpack.c.bf16 %v552, %v547
        %v863 = vpack.c.bf16 %v562, %v557
        %v864 = vpack.c.bf16 %v572, %v567
        %v881 = vunpack.c.l.b16 %v849
        %v882 = vunpack.c.h.b16 %v849
        %v883 = vunpack.c.l.b16 %v850
        %v884 = vunpack.c.h.b16 %v850
        %v885 = vunpack.c.l.b16 %v851
        %v886 = vunpack.c.h.b16 %v851
        %v887 = vunpack.c.l.b16 %v852
        %v888 = vunpack.c.h.b16 %v852
        %v889 = vunpack.c.l.b16 %v853
        %v890 = vunpack.c.h.b16 %v853
        %v891 = vunpack.c.l.b16 %v854
        %v892 = vunpack.c.h.b16 %v854
        %v893 = vunpack.c.l.b16 %v855
        %v894 = vunpack.c.h.b16 %v855
        %v895 = vunpack.c.l.b16 %v856
        %v896 = vunpack.c.h.b16 %v856
        %v897 = vunpack.c.l.b16 %v857
        %v898 = vunpack.c.h.b16 %v857
        %v899 = vunpack.c.l.b16 %v858
        %v900 = vunpack.c.h.b16 %v858
        %v901 = vunpack.c.l.b16 %v859
        %v902 = vunpack.c.h.b16 %v859
        %v903 = vunpack.c.l.b16 %v860
        %v904 = vunpack.c.h.b16 %v860
        %v905 = vunpack.c.l.b16 %v861
        %v906 = vunpack.c.h.b16 %v861
        %v907 = vunpack.c.l.b16 %v862
        %v908 = vunpack.c.h.b16 %v862
        %v909 = vunpack.c.l.b16 %v863
        %v910 = vunpack.c.h.b16 %v863
        %v911 = vunpack.c.l.b16 %v864
        %v912 = vunpack.c.h.b16 %v864
        %v913 = vpack.c.b16 %v881, %v881
        %v914 = vpack.c.b16 %v882, %v882
        %v915 = vpack.c.b16 %v883, %v883
        %v916 = vpack.c.b16 %v884, %v884
        %v917 = vpack.c.b16 %v885, %v885
        %v918 = vpack.c.b16 %v886, %v886
        %v919 = vpack.c.b16 %v887, %v887
        %v920 = vpack.c.b16 %v888, %v888
        %v921 = vpack.c.b16 %v889, %v889
        %v922 = vpack.c.b16 %v890, %v890
        %v923 = vpack.c.b16 %v891, %v891
        %v924 = vpack.c.b16 %v892, %v892
        %v925 = vpack.c.b16 %v893, %v893
        %v926 = vpack.c.b16 %v894, %v894
        %v927 = vpack.c.b16 %v895, %v895
        %v928 = vpack.c.b16 %v896, %v896
        %v929 = vpack.c.b16 %v897, %v897
        %v930 = vpack.c.b16 %v898, %v898
        %v931 = vpack.c.b16 %v899, %v899
        %v932 = vpack.c.b16 %v900, %v900
        %v933 = vpack.c.b16 %v901, %v901
        %v934 = vpack.c.b16 %v902, %v902
        %v935 = vpack.c.b16 %v903, %v903
        %v936 = vpack.c.b16 %v904, %v904
        %v937 = vpack.c.b16 %v905, %v905
        %v938 = vpack.c.b16 %v906, %v906
        %v939 = vpack.c.b16 %v907, %v907
        %v940 = vpack.c.b16 %v908, %v908
        %v941 = vpack.c.b16 %v909, %v909
        %v942 = vpack.c.b16 %v910, %v910
        %v943 = vpack.c.b16 %v911, %v911
        %v944 = vpack.c.b16 %v912, %v912
        %977 = vst [vmem:[%s192] sm:$0xf] %v913
        %978 = vst [vmem:[%s192 + $0x4] sm:$0xf] %v914
        %979 = vst [vmem:[%s192 + $0x8] sm:$0xf] %v915
        %980 = vst [vmem:[%s192 + $0xc] sm:$0xf] %v916
        %981 = vst [vmem:[%s192 + $0x10] sm:$0xf] %v917
        %982 = vst [vmem:[%s192 + $0x14] sm:$0xf] %v918
        %983 = vst [vmem:[%s192 + $0x18] sm:$0xf] %v919
        %984 = vst [vmem:[%s192 + $0x1c] sm:$0xf] %v920
        %985 = vst [vmem:[%s192 + $0x20] sm:$0xf] %v921
        %986 = vst [vmem:[%s192 + $0x24] sm:$0xf] %v922
        %987 = vst [vmem:[%s192 + $0x28] sm:$0xf] %v923
        %988 = vst [vmem:[%s192 + $0x2c] sm:$0xf] %v924
        %989 = vst [vmem:[%s192 + $0x30] sm:$0xf] %v925
        %990 = vst [vmem:[%s192 + $0x34] sm:$0xf] %v926
        %991 = vst [vmem:[%s192 + $0x38] sm:$0xf] %v927
        %992 = vst [vmem:[%s192 + $0x3c] sm:$0xf] %v928
        %993 = vst [vmem:[%s192 + $0x40] sm:$0xf] %v929
        %994 = vst [vmem:[%s192 + $0x44] sm:$0xf] %v930
        %995 = vst [vmem:[%s192 + $0x48] sm:$0xf] %v931
        %996 = vst [vmem:[%s192 + $0x4c] sm:$0xf] %v932
        %997 = vst [vmem:[%s192 + $0x50] sm:$0xf] %v933
        %998 = vst [vmem:[%s192 + $0x54] sm:$0xf] %v934
        %999 = vst [vmem:[%s192 + $0x58] sm:$0xf] %v935
        %1000 = vst [vmem:[%s192 + $0x5c] sm:$0xf] %v936
        %1001 = vst [vmem:[%s192 + $0x60] sm:$0xf] %v937
        %1002 = vst [vmem:[%s192 + $0x64] sm:$0xf] %v938
        %1003 = vst [vmem:[%s192 + $0x68] sm:$0xf] %v939
        %1004 = vst [vmem:[%s192 + $0x6c] sm:$0xf] %v940
        %1005 = vst [vmem:[%s192 + $0x70] sm:$0xf] %v941
        %1006 = vst [vmem:[%s192 + $0x74] sm:$0xf] %v942
        %1007 = vst [vmem:[%s192 + $0x78] sm:$0xf] %v943
        %1008 = vst [vmem:[%s192 + $0x7c] sm:$0xf] %v944
        %s1009 = sand.u32 %s95, 1
        %s1010 = scalar_lea.sflag [#allocation3], %s1009
        %s1011 = sand.u32 %s95, 1
        %s1012 = smul.addr %s1011, 128
        %s1013 = scalar_lea.vmem [#allocation2], %s1012
        %s1014 = smul.u32 32, %s19
        %p1015 = scmp.lt.s32.totalorder %s1014, 63
        %s1016 = scalar_select %p1015, %s1014, 63
        %s1017 = smul.addr %s1016, 8
        %s1018 = scalar_lea.vmem %s4, %s1017
        // Predicated region
        $region33: #{tpu_custom_call.1} parent=31 // pred_check
          %p1019 = pneg %p105
        $region34: #{tpu_custom_call.1} parent=31 // pred_check_branch
          %1021 = sbr.rel (%p1019) target = $region36
        $region35: #{tpu_custom_call.1} parent=31 // pred_region
          %s1022 = smul.u32 32, %s19
          %s1024 = ssub.s32 2048, 2048
          %1025 = vsyncadd %s1010, %s1024
          %s1026 = smul.addr %s1022, 64
          %s1027 = scalar_lea.hbm %s3, %s1026
          %s1028 = sshll.u32 %s1013, 4
          %s1029 = int_to_ptr.vmem [resolvable:$true] %s1028
          %1034 = dma.vmem_to_hbm [thread:$0]  %s1029, 2048, %s1027, %s1010, 64, 64, 4
        $region36: #{tpu_custom_call.1} parent=31 // pred_fallthru
          _
        // Predicated region
        $region37: #{tpu_custom_call.1} parent=31 // pred_check
          %p1035 = pneg %p131
        $region38: #{tpu_custom_call.1} parent=31 // pred_check_branch
          %1037 = sbr.rel (%p1035) target = $region40
        $region39: #{tpu_custom_call.1} parent=31 // pred_region
          %s1038 = smul.u32 32, %s19
        $region40: #{tpu_custom_call.1} parent=31 // pred_fallthru
          _
      $region32: #{tpu_custom_call.1} parent=5 // pred_fallthru
        _
      %p1039 = scmp.le.s32.totalorder 2, %s14
      // Predicated region
      $region41: #{tpu_custom_call.1} parent=5 // pred_check
        %p1040 = pneg %p1039
      $region42: #{tpu_custom_call.1} parent=5 // pred_check_branch
        %1042 = sbr.rel (%p1040) target = $region44
      $region43: #{tpu_custom_call.1} parent=5 // pred_region
        %s1043 = ssub.s32 %s14, 2
        // Predicated region
        $region45: #{tpu_custom_call.1} parent=43 // pred_check
          %p1044 = pneg %p111
        $region46: #{tpu_custom_call.1} parent=43 // pred_check_branch
          %1046 = sbr.rel (%p1044) target = $region48
        $region47: #{tpu_custom_call.1} parent=43 // pred_region
          %s1047 = sand.u32 %s96, 1
          %s1048 = scalar_lea.sflag [#allocation3], %s1047
          %s1049 = sand.u32 %s96, 1
          %s1050 = smul.addr %s1049, 128
          %s1051 = scalar_lea.vmem [#allocation2], %s1050
          %1052 = dma.done %s1048, 2048
        $region48: #{tpu_custom_call.1} parent=43 // pred_fallthru
          _
        // Predicated region
        $region49: #{tpu_custom_call.1} parent=43 // pred_check
          %p1053 = pneg %p137
        $region50: #{tpu_custom_call.1} parent=43 // pred_check_branch
          %1055 = sbr.rel (%p1053) target = $region52
        $region51: #{tpu_custom_call.1} parent=43 // pred_region
          %s1056 = smul.u32 32, %s20
          %p1057 = scmp.lt.s32.totalorder %s1056, 63
          %s1058 = scalar_select %p1057, %s1056, 63
          %s1059 = smul.addr %s1058, 8
          %s1060 = scalar_lea.vmem %s4, %s1059
        $region52: #{tpu_custom_call.1} parent=43 // pred_fallthru
          _
      $region44: #{tpu_custom_call.1} parent=5 // pred_fallthru
        _
    $region6: #{tpu_custom_call.1} parent=1 // loop_footer
      %s18 = sadd.s32 1, %s14
    $region7: #{tpu_custom_call.1} parent=1 // loop_footer_branch
      %13 = sbr.rel target = $region3
    $region8: #{tpu_custom_call.1} parent=1 // loop_exit
      _
    %1061 = vsyncpa [#allocation3], 1
    %s1062 = scalar_lea.sflag [#allocation3], 1
    %1063 = vsyncpa %s1062, 1

</llo_original>
